<compile_context>
chip_gen: v7x
topology: tpu7x:2x2x1
jax: 0.10.0
libtpu: 0.0.40
codegen_flags: <defaults>
</compile_context>

<pallas_src>
import functools

import jax
import jax.numpy as jnp
from jax.experimental import pallas as pl
from jax.experimental.pallas import tpu as pltpu


def fr_image_proj_kernel(x_ref, w_ref, b_ref, g_ref, beta_ref, o_ref,
                         *, eps, cross_dim, token_block):
    # x_ref : (B, D_in) f32            w_ref : (1, D_in, TB*C) bf16 (or f32)
    # b_ref : (1, TB*C) f32            g_ref / beta_ref : (1, C) f32
    # o_ref : (B, TB*C)
    w = w_ref[0]                                   # (D_in, TB*C), stored dtype
    x = x_ref[...].astype(w.dtype)                 # tiny activation cast only

    # Linear for this block of tokens: one MXU matmul, bf16 operands straight
    # from VMEM, f32 accumulation (no f32 materialization of the weight).
    y = jnp.dot(x, w, preferred_element_type=jnp.float32) + b_ref[...]  # (B, TB*C) f32

    gamma = g_ref[...]                              # (1, C)
    beta = beta_ref[...]                            # (1, C)

    # LayerNorm per token (biased variance, as torch.nn.LayerNorm).  C stays
    # the lane axis; static slices at multiples of C (a multiple of 128) keep
    # loads/stores unmasked.  TB is small (1-4), fully unrolled.
    for t in range(token_block):
        lo = t * cross_dim
        y_t = y[:, lo:lo + cross_dim]               # (B, C)
        mean = jnp.mean(y_t, axis=-1, keepdims=True)
        var = jnp.mean(jnp.square(y_t - mean), axis=-1, keepdims=True)
        y_n = (y_t - mean) * jax.lax.rsqrt(var + eps)
        o_ref[:, lo:lo + cross_dim] = (y_n * gamma + beta).astype(o_ref.dtype)


def _tensorcores_per_chip():
    """Best-effort TensorCore count per chip (v4 megacore / v7x have 2)."""
    try:
        kind = jax.devices()[0].device_kind.lower()
    except Exception:
        return 1
    return 2 if ("v7" in kind or "v4" in kind) else 1


def auto_token_block(num_tokens):
    """Tokens per grid step: whole weight in one step on 1-TC chips; split in
    two on 2-TC chips so each core streams half the weight."""
    if _tensorcores_per_chip() >= 2 and num_tokens % 2 == 0:
        return num_tokens // 2      # grid=2 -> one half-weight stream per TC
    return num_tokens               # grid=1 -> single contiguous weight DMA


def pack_fr_proj_params(proj_w, proj_b, *, num_tokens, cross_dim,
                        token_block=None, weight_dtype=jnp.bfloat16):
    """One-time (init-time) repack of the PyTorch Linear parameters.

    proj_w: [T*C, D_in] (PyTorch layout) -> [num_blocks, D_in, tb*C] in
            weight_dtype, so each grid step's weight DMA is a contiguous slab.
    proj_b: [T*C] -> [1, T*C] f32.
    Done once when the adapter is built, never in the forward path.
    """
    out_dim, d_in = proj_w.shape
    assert out_dim == num_tokens * cross_dim, (proj_w.shape, num_tokens, cross_dim)
    if token_block is None:
        token_block = auto_token_block(num_tokens)
    assert num_tokens % token_block == 0, (num_tokens, token_block)
    num_blocks = num_tokens // token_block

    w = jnp.asarray(proj_w).T.astype(weight_dtype)                 # (D_in, T*C)
    w = w.reshape(d_in, num_blocks, token_block * cross_dim)
    w = jnp.transpose(w, (1, 0, 2))                                # (NB, D_in, tb*C)
    b = jnp.asarray(proj_b).reshape(1, num_tokens * cross_dim).astype(jnp.float32)
    return w, b, token_block


def fr_image_proj(fr_embeds, w_packed, b_packed, ln_gamma, ln_beta,
                  *, num_tokens, cross_dim, eps=1e-5, out_dtype=None):
    """fr_embeds: [B, D_in] -> [B, num_tokens, cross_dim]."""
    B, d_in = fr_embeds.shape
    num_blocks, wd, blk = w_packed.shape
    assert wd == d_in and num_blocks * blk == num_tokens * cross_dim, \
        (w_packed.shape, d_in, num_tokens, cross_dim)
    token_block = blk // cross_dim
    # Pass bf16 here if the downstream cross-attention consumes bf16 tokens
    # (halves the output writeback); default keeps the input dtype.
    out_dtype = out_dtype or fr_embeds.dtype

    g2 = ln_gamma.reshape(1, cross_dim).astype(jnp.float32)
    be2 = ln_beta.reshape(1, cross_dim).astype(jnp.float32)
    b2 = b_packed.reshape(1, num_tokens * cross_dim).astype(jnp.float32)

    # Memory-bound cost hint for the XLA scheduler (bytes ~= the weight stream).
    w_bytes = int(w_packed.size) * w_packed.dtype.itemsize
    out_bytes = B * num_tokens * cross_dim * jnp.dtype(out_dtype).itemsize
    in_bytes = (fr_embeds.size * fr_embeds.dtype.itemsize
                + b2.size * 4 + g2.size * 4 + be2.size * 4)
    cost = pl.CostEstimate(
        flops=2 * B * d_in * num_tokens * cross_dim,
        transcendentals=B * num_tokens,            # one rsqrt per (row, token)
        bytes_accessed=int(w_bytes + out_bytes + in_bytes))

    out_flat = pl.pallas_call(
        functools.partial(fr_image_proj_kernel, eps=eps,
                          cross_dim=cross_dim, token_block=token_block),
        out_shape=jax.ShapeDtypeStruct((B, num_tokens * cross_dim), out_dtype),
        grid_spec=pltpu.PrefetchScalarGridSpec(
            num_scalar_prefetch=0,
            grid=(num_blocks,),
            in_specs=[
                pl.BlockSpec((B, d_in), lambda t: (0, 0)),          # x (resident)
                pl.BlockSpec((1, d_in, blk), lambda t: (t, 0, 0)),  # contiguous W slab
                pl.BlockSpec((1, blk), lambda t: (0, t)),           # bias slab
                pl.BlockSpec((1, cross_dim), lambda t: (0, 0)),     # ln gamma
                pl.BlockSpec((1, cross_dim), lambda t: (0, 0)),     # ln beta
            ],
            out_specs=pl.BlockSpec((B, blk), lambda t: (0, t)),
        ),
        # "parallel" is a no-op on single-TC chips (grid=1 there anyway) and
        # shards the 2-step grid across both TensorCores on v4/v7x parts.
        compiler_params=pltpu.CompilerParams(
            dimension_semantics=("parallel",)),
        cost_estimate=cost,
    )(fr_embeds, w_packed, b2, g2, be2)

    # [B, T*C] -> [B, T, C] is a trailing-dim reshape: no transpose, no HBM pass.
    return out_flat.reshape(B, num_tokens, cross_dim)


def reference(fr_embeds, proj_w, proj_b, ln_gamma, ln_beta,
              *, num_tokens, cross_dim, eps=1e-5):
    y = fr_embeds @ proj_w.T + proj_b                          # [B, T*C]
    y = y.reshape(-1, num_tokens, cross_dim)
    mean = jnp.mean(y, axis=-1, keepdims=True)
    var = jnp.mean(jnp.square(y - mean), axis=-1, keepdims=True)
    return (y - mean) * jax.lax.rsqrt(var + eps) * ln_gamma + ln_beta


if __name__ == "__main__":
    # Small shapes consistent with the module's forward:
    # fr_embeds [B, fr_embeddings_dim] -> [B, fr_extra_context_tokens, cross_attention_dim]
    B = 8
    FR_DIM = 128               # fr_embeddings_dim (512 in the original)
    CROSS_DIM = 256            # cross_attention_dim (1024 in the original)
    N_TOKENS = 4               # fr_extra_context_tokens

    key = jax.random.PRNGKey(0)
    k_x, k_w, k_b, k_g, k_be = jax.random.split(key, 5)

    fr_embeds = jax.random.normal(k_x, (B, FR_DIM), dtype=jnp.float32)

    # Synthetic parameters in the PyTorch layout (Linear weight [out, in]).
    proj_w = jax.random.normal(k_w, (N_TOKENS * CROSS_DIM, FR_DIM),
                               dtype=jnp.float32) * (1.0 / jnp.sqrt(FR_DIM))
    proj_b = jax.random.normal(k_b, (N_TOKENS * CROSS_DIM,), dtype=jnp.float32) * 0.02
    ln_gamma = 1.0 + jax.random.normal(k_g, (CROSS_DIM,), dtype=jnp.float32) * 0.05
    ln_beta = jax.random.normal(k_be, (CROSS_DIM,), dtype=jnp.float32) * 0.05

    # Init-time repack: per-block-contiguous [NB, D_in, tb*C] bf16 layout;
    # token_block (and hence grid length) auto-chosen per chip generation.
    w_packed, b_packed, token_block = pack_fr_proj_params(
        proj_w, proj_b, num_tokens=N_TOKENS, cross_dim=CROSS_DIM,
        weight_dtype=jnp.bfloat16)

    out = fr_image_proj(fr_embeds, w_packed, b_packed, ln_gamma, ln_beta,
                        num_tokens=N_TOKENS, cross_dim=CROSS_DIM)
    out = jax.block_until_ready(out)

    # Reference uses the same stored bf16 weights upcast to f32 and the same
    # bf16-rounded activations, so the check isolates kernel correctness
    # (accumulation order only) from the intentional bf16 storage/MXU feed.
    w_full = jnp.transpose(w_packed, (1, 0, 2)).reshape(
        FR_DIM, N_TOKENS * CROSS_DIM).astype(jnp.float32)          # [D_in, T*C]
    x_bf16 = fr_embeds.astype(jnp.bfloat16).astype(jnp.float32)
    ref = reference(x_bf16, w_full.T, proj_b, ln_gamma, ln_beta,
                    num_tokens=N_TOKENS, cross_dim=CROSS_DIM)

    assert out.shape == (B, N_TOKENS, CROSS_DIM), out.shape
    err = float(jnp.max(jnp.abs(out.astype(jnp.float32) - ref)))
    assert err < 2e-3, err
    print("KERNEL_OK")
</pallas_src>

<mosaic_0001>
module attributes {stable_mosaic.version = 11 : i64} {
  func.func @fr_image_proj_kernel(%arg0: i32, %arg1: memref<8x128xf32, #tpu.memory_space<vmem>>, %arg2: memref<1x128x1024xbf16, #tpu.memory_space<vmem>>, %arg3: memref<1x1024xf32, #tpu.memory_space<vmem>>, %arg4: memref<1x256xf32, #tpu.memory_space<vmem>>, %arg5: memref<1x256xf32, #tpu.memory_space<vmem>>, %arg6: memref<8x1024xf32, #tpu.memory_space<vmem>>) attributes {dimension_semantics = [#tpu.dimension_semantics<parallel>], iteration_bounds = array<i64: 1>, scalar_prefetch = 0 : i64, scratch_operands = 0 : i64, tpu.core_type = #tpu.core_type<tc>, window_params = [{pipeline_mode = #tpu.pipeline_mode<synchronous>, transform_indices = @transform_0, window_bounds = array<i64: 8, 128>}, {transform_indices = @transform_1, window_bounds = array<i64: 1, 128, 1024>}, {transform_indices = @transform_2, window_bounds = array<i64: 1, 1024>}, {pipeline_mode = #tpu.pipeline_mode<synchronous>, transform_indices = @transform_3, window_bounds = array<i64: 1, 256>}, {pipeline_mode = #tpu.pipeline_mode<synchronous>, transform_indices = @transform_4, window_bounds = array<i64: 1, 256>}, {transform_indices = @transform_5, window_bounds = array<i64: 8, 1024>}]} {
    %c0 = arith.constant 0 : index
    %c0_0 = arith.constant 0 : index
    %c0_1 = arith.constant 0 : index
    %0 = vector.load %arg2[%c0, %c0_0, %c0_1] : memref<1x128x1024xbf16, #tpu.memory_space<vmem>>, vector<1x128x1024xbf16>
    %1 = vector.shape_cast %0 : vector<1x128x1024xbf16> to vector<128x1024xbf16>
    %c0_2 = arith.constant 0 : index
    %c0_3 = arith.constant 0 : index
    %2 = vector.load %arg1[%c0_2, %c0_3] : memref<8x128xf32, #tpu.memory_space<vmem>>, vector<8x128xf32>
    %3 = arith.truncf %2 : vector<8x128xf32> to vector<8x128xbf16>
    %cst = arith.constant dense<0.000000e+00> : vector<8x1024xf32>
    %4 = tpu.matmul %3, %1, %cst {dimension_numbers = #tpu.dot_dimension_numbers<[1], [0], [0], [1], [0, 0, 1, 1], [], []>} : vector<8x128xbf16>, vector<128x1024xbf16>, vector<8x1024xf32> -> vector<8x1024xf32>
    %c0_4 = arith.constant 0 : index
    %c0_5 = arith.constant 0 : index
    %5 = vector.load %arg3[%c0_4, %c0_5] : memref<1x1024xf32, #tpu.memory_space<vmem>>, vector<1x1024xf32>
    %6 = vector.broadcast %5 : vector<1x1024xf32> to vector<8x1024xf32>
    %7 = arith.addf %4, %6 : vector<8x1024xf32>
    %c0_6 = arith.constant 0 : index
    %c0_7 = arith.constant 0 : index
    %8 = vector.load %arg4[%c0_6, %c0_7] : memref<1x256xf32, #tpu.memory_space<vmem>>, vector<1x256xf32>
    %c0_8 = arith.constant 0 : index
    %c0_9 = arith.constant 0 : index
    %9 = vector.load %arg5[%c0_8, %c0_9] : memref<1x256xf32, #tpu.memory_space<vmem>>, vector<1x256xf32>
    %10 = vector.extract_strided_slice %7 {offsets = [0, 0], sizes = [8, 256], strides = [1, 1]} : vector<8x1024xf32> to vector<8x256xf32>
    %cst_10 = arith.constant dense<0.000000e+00> : vector<8xf32>
    %11 = vector.multi_reduction <add>, %10, %cst_10 [1] : vector<8x256xf32> to vector<8xf32>
    %12 = vector.shape_cast %11 : vector<8xf32> to vector<8x1xf32>
    %cst_11 = arith.constant 2.560000e+02 : f32
    %13 = vector.broadcast %cst_11 : f32 to vector<8x1xf32>
    %14 = arith.divf %12, %13 : vector<8x1xf32>
    %15 = vector.broadcast %14 : vector<8x1xf32> to vector<8x256xf32>
    %16 = arith.subf %10, %15 : vector<8x256xf32>
    %17 = arith.mulf %16, %16 : vector<8x256xf32>
    %cst_12 = arith.constant dense<0.000000e+00> : vector<8xf32>
    %18 = vector.multi_reduction <add>, %17, %cst_12 [1] : vector<8x256xf32> to vector<8xf32>
    %19 = vector.shape_cast %18 : vector<8xf32> to vector<8x1xf32>
    %cst_13 = arith.constant 2.560000e+02 : f32
    %20 = vector.broadcast %cst_13 : f32 to vector<8x1xf32>
    %21 = arith.divf %19, %20 : vector<8x1xf32>
    %22 = vector.broadcast %14 : vector<8x1xf32> to vector<8x256xf32>
    %23 = arith.subf %10, %22 : vector<8x256xf32>
    %cst_14 = arith.constant 9.99999974E-6 : f32
    %24 = vector.broadcast %cst_14 : f32 to vector<8x1xf32>
    %25 = arith.addf %21, %24 : vector<8x1xf32>
    %26 = math.rsqrt %25 : vector<8x1xf32>
    %27 = vector.broadcast %26 : vector<8x1xf32> to vector<8x256xf32>
    %28 = arith.mulf %23, %27 : vector<8x256xf32>
    %29 = vector.broadcast %8 : vector<1x256xf32> to vector<8x256xf32>
    %30 = arith.mulf %28, %29 : vector<8x256xf32>
    %31 = vector.broadcast %9 : vector<1x256xf32> to vector<8x256xf32>
    %32 = arith.addf %30, %31 : vector<8x256xf32>
    %c0_15 = arith.constant 0 : index
    %c0_16 = arith.constant 0 : index
    %33 = vector.load %arg6[%c0_15, %c0_16] : memref<8x1024xf32, #tpu.memory_space<vmem>>, vector<8x256xf32>
    tpu.vector_store %arg6[%c0_15, %c0_16], %32 {strides = array<i32>} : memref<8x1024xf32, #tpu.memory_space<vmem>>, vector<8x256xf32>,
    %34 = vector.extract_strided_slice %7 {offsets = [0, 256], sizes = [8, 256], strides = [1, 1]} : vector<8x1024xf32> to vector<8x256xf32>
    %cst_17 = arith.constant dense<0.000000e+00> : vector<8xf32>
    %35 = vector.multi_reduction <add>, %34, %cst_17 [1] : vector<8x256xf32> to vector<8xf32>
    %36 = vector.shape_cast %35 : vector<8xf32> to vector<8x1xf32>
    %cst_18 = arith.constant 2.560000e+02 : f32
    %37 = vector.broadcast %cst_18 : f32 to vector<8x1xf32>
    %38 = arith.divf %36, %37 : vector<8x1xf32>
    %39 = vector.broadcast %38 : vector<8x1xf32> to vector<8x256xf32>
    %40 = arith.subf %34, %39 : vector<8x256xf32>
    %41 = arith.mulf %40, %40 : vector<8x256xf32>
    %cst_19 = arith.constant dense<0.000000e+00> : vector<8xf32>
    %42 = vector.multi_reduction <add>, %41, %cst_19 [1] : vector<8x256xf32> to vector<8xf32>
    %43 = vector.shape_cast %42 : vector<8xf32> to vector<8x1xf32>
    %cst_20 = arith.constant 2.560000e+02 : f32
    %44 = vector.broadcast %cst_20 : f32 to vector<8x1xf32>
    %45 = arith.divf %43, %44 : vector<8x1xf32>
    %46 = vector.broadcast %38 : vector<8x1xf32> to vector<8x256xf32>
    %47 = arith.subf %34, %46 : vector<8x256xf32>
    %cst_21 = arith.constant 9.99999974E-6 : f32
    %48 = vector.broadcast %cst_21 : f32 to vector<8x1xf32>
    %49 = arith.addf %45, %48 : vector<8x1xf32>
    %50 = math.rsqrt %49 : vector<8x1xf32>
    %51 = vector.broadcast %50 : vector<8x1xf32> to vector<8x256xf32>
    %52 = arith.mulf %47, %51 : vector<8x256xf32>
    %53 = vector.broadcast %8 : vector<1x256xf32> to vector<8x256xf32>
    %54 = arith.mulf %52, %53 : vector<8x256xf32>
    %55 = vector.broadcast %9 : vector<1x256xf32> to vector<8x256xf32>
    %56 = arith.addf %54, %55 : vector<8x256xf32>
    %c0_22 = arith.constant 0 : index
    %c256 = arith.constant 256 : index
    %57 = vector.load %arg6[%c0_22, %c256] : memref<8x1024xf32, #tpu.memory_space<vmem>>, vector<8x256xf32>
    tpu.vector_store %arg6[%c0_22, %c256], %56 {strides = array<i32>} : memref<8x1024xf32, #tpu.memory_space<vmem>>, vector<8x256xf32>,
    %58 = vector.extract_strided_slice %7 {offsets = [0, 512], sizes = [8, 256], strides = [1, 1]} : vector<8x1024xf32> to vector<8x256xf32>
    %cst_23 = arith.constant dense<0.000000e+00> : vector<8xf32>
    %59 = vector.multi_reduction <add>, %58, %cst_23 [1] : vector<8x256xf32> to vector<8xf32>
    %60 = vector.shape_cast %59 : vector<8xf32> to vector<8x1xf32>
    %cst_24 = arith.constant 2.560000e+02 : f32
    %61 = vector.broadcast %cst_24 : f32 to vector<8x1xf32>
    %62 = arith.divf %60, %61 : vector<8x1xf32>
    %63 = vector.broadcast %62 : vector<8x1xf32> to vector<8x256xf32>
    %64 = arith.subf %58, %63 : vector<8x256xf32>
    %65 = arith.mulf %64, %64 : vector<8x256xf32>
    %cst_25 = arith.constant dense<0.000000e+00> : vector<8xf32>
    %66 = vector.multi_reduction <add>, %65, %cst_25 [1] : vector<8x256xf32> to vector<8xf32>
    %67 = vector.shape_cast %66 : vector<8xf32> to vector<8x1xf32>
    %cst_26 = arith.constant 2.560000e+02 : f32
    %68 = vector.broadcast %cst_26 : f32 to vector<8x1xf32>
    %69 = arith.divf %67, %68 : vector<8x1xf32>
    %70 = vector.broadcast %62 : vector<8x1xf32> to vector<8x256xf32>
    %71 = arith.subf %58, %70 : vector<8x256xf32>
    %cst_27 = arith.constant 9.99999974E-6 : f32
    %72 = vector.broadcast %cst_27 : f32 to vector<8x1xf32>
    %73 = arith.addf %69, %72 : vector<8x1xf32>
    %74 = math.rsqrt %73 : vector<8x1xf32>
    %75 = vector.broadcast %74 : vector<8x1xf32> to vector<8x256xf32>
    %76 = arith.mulf %71, %75 : vector<8x256xf32>
    %77 = vector.broadcast %8 : vector<1x256xf32> to vector<8x256xf32>
    %78 = arith.mulf %76, %77 : vector<8x256xf32>
    %79 = vector.broadcast %9 : vector<1x256xf32> to vector<8x256xf32>
    %80 = arith.addf %78, %79 : vector<8x256xf32>
    %c0_28 = arith.constant 0 : index
    %c512 = arith.constant 512 : index
    %81 = vector.load %arg6[%c0_28, %c512] : memref<8x1024xf32, #tpu.memory_space<vmem>>, vector<8x256xf32>
    tpu.vector_store %arg6[%c0_28, %c512], %80 {strides = array<i32>} : memref<8x1024xf32, #tpu.memory_space<vmem>>, vector<8x256xf32>,
    %82 = vector.extract_strided_slice %7 {offsets = [0, 768], sizes = [8, 256], strides = [1, 1]} : vector<8x1024xf32> to vector<8x256xf32>
    %cst_29 = arith.constant dense<0.000000e+00> : vector<8xf32>
    %83 = vector.multi_reduction <add>, %82, %cst_29 [1] : vector<8x256xf32> to vector<8xf32>
    %84 = vector.shape_cast %83 : vector<8xf32> to vector<8x1xf32>
    %cst_30 = arith.constant 2.560000e+02 : f32
    %85 = vector.broadcast %cst_30 : f32 to vector<8x1xf32>
    %86 = arith.divf %84, %85 : vector<8x1xf32>
    %87 = vector.broadcast %86 : vector<8x1xf32> to vector<8x256xf32>
    %88 = arith.subf %82, %87 : vector<8x256xf32>
    %89 = arith.mulf %88, %88 : vector<8x256xf32>
    %cst_31 = arith.constant dense<0.000000e+00> : vector<8xf32>
    %90 = vector.multi_reduction <add>, %89, %cst_31 [1] : vector<8x256xf32> to vector<8xf32>
    %91 = vector.shape_cast %90 : vector<8xf32> to vector<8x1xf32>
    %cst_32 = arith.constant 2.560000e+02 : f32
    %92 = vector.broadcast %cst_32 : f32 to vector<8x1xf32>
    %93 = arith.divf %91, %92 : vector<8x1xf32>
    %94 = vector.broadcast %86 : vector<8x1xf32> to vector<8x256xf32>
    %95 = arith.subf %82, %94 : vector<8x256xf32>
    %cst_33 = arith.constant 9.99999974E-6 : f32
    %96 = vector.broadcast %cst_33 : f32 to vector<8x1xf32>
    %97 = arith.addf %93, %96 : vector<8x1xf32>
    %98 = math.rsqrt %97 : vector<8x1xf32>
    %99 = vector.broadcast %98 : vector<8x1xf32> to vector<8x256xf32>
    %100 = arith.mulf %95, %99 : vector<8x256xf32>
    %101 = vector.broadcast %8 : vector<1x256xf32> to vector<8x256xf32>
    %102 = arith.mulf %100, %101 : vector<8x256xf32>
    %103 = vector.broadcast %9 : vector<1x256xf32> to vector<8x256xf32>
    %104 = arith.addf %102, %103 : vector<8x256xf32>
    %c0_34 = arith.constant 0 : index
    %c768 = arith.constant 768 : index
    %105 = vector.load %arg6[%c0_34, %c768] : memref<8x1024xf32, #tpu.memory_space<vmem>>, vector<8x256xf32>
    tpu.vector_store %arg6[%c0_34, %c768], %104 {strides = array<i32>} : memref<8x1024xf32, #tpu.memory_space<vmem>>, vector<8x256xf32>,
    return
  }
  func.func @transform_0(%arg0: i32) -> (i32, i32) {
    %c0_i32 = arith.constant 0 : i32
    %c0_i32_0 = arith.constant 0 : i32
    %c0_i32_1 = arith.constant 0 : i32
    return %c0_i32, %c0_i32_0 : i32, i32
  }
  func.func @transform_1(%arg0: i32) -> (i32, i32, i32) {
    %c0_i32 = arith.constant 0 : i32
    %c0_i32_0 = arith.constant 0 : i32
    %c0_i32_1 = arith.constant 0 : i32
    return %arg0, %c0_i32, %c0_i32_0 : i32, i32, i32
  }
  func.func @transform_2(%arg0: i32) -> (i32, i32) {
    %c0_i32 = arith.constant 0 : i32
    %c0_i32_0 = arith.constant 0 : i32
    return %c0_i32, %arg0 : i32, i32
  }
  func.func @transform_3(%arg0: i32) -> (i32, i32) {
    %c0_i32 = arith.constant 0 : i32
    %c0_i32_0 = arith.constant 0 : i32
    %c0_i32_1 = arith.constant 0 : i32
    return %c0_i32, %c0_i32_0 : i32, i32
  }
  func.func @transform_4(%arg0: i32) -> (i32, i32) {
    %c0_i32 = arith.constant 0 : i32
    %c0_i32_0 = arith.constant 0 : i32
    %c0_i32_1 = arith.constant 0 : i32
    return %c0_i32, %c0_i32_0 : i32, i32
  }
  func.func @transform_5(%arg0: i32) -> (i32, i32) {
    %c0_i32 = arith.constant 0 : i32
    %c0_i32_0 = arith.constant 0 : i32
    return %c0_i32, %arg0 : i32, i32
  }
}

</mosaic_0001>

<llo_original>
// kernel: tpu_custom_call.1
$region0: #{tpu_custom_call.1}
  #allocation0 [shape = 'u32[]', space=smem, size = 0x4, offset = 0x4, fixed_abs, tag = 'smem constant byte address 0x4 - core index']
  #allocation1 [shape = 'u32[144,128]{1,0:T(1,128)}', space=vmem, size = 0x12000, scoped, tag = 'internal scratch']
  %s0 = inlined_call_operand.hbm [shape: f32[8,128], index: 0, kind: input, shape index: {}]
  %s1 = inlined_call_operand.hbm [shape: bf16[1,128,1024], index: 1, kind: input, shape index: {}]
  %s2 = inlined_call_operand.hbm [shape: f32[1,1024], index: 2, kind: input, shape index: {}]
  %s3 = inlined_call_operand.vmem [shape: f32[1,256], index: 3, kind: input, shape index: {}]
  %s4 = inlined_call_operand.vmem [shape: f32[1,256], index: 4, kind: input, shape index: {}]
  %s5 = inlined_call_operand.hbm [shape: f32[8,1024], index: 5, kind: output, shape index: {}]
  %s6 = sld [smem:[#allocation0]]
  $region42: #{tpu_custom_call.1} parent=0
    _
  %s8 = ssub.s32 1, %s6
  %s9 = scalar_select 0, %s8, %s6
  $region1: #{tpu_custom_call.1} parent=0
    #allocation2 [shape = 'u8[4096]{0}', space=vmem, size = 0x1000, scoped, tag = 'input window, operand 0, single buffered']
    #allocation3 [shape = 's32[1]{0}', space=sflag, size = 0x4, scoped, tag = 'scoped memory for tpu_custom_call.1']
    #allocation4 [shape = 's32[1]{0}', space=sflag, size = 0x4, scoped, tag = 'scoped memory for tpu_custom_call.1']
    #allocation5 [shape = 'u8[262144]{0}', space=vmem, size = 0x40000, scoped, tag = 'input window, operand 1, single buffered']
    #allocation6 [shape = 's32[1]{0}', space=sflag, size = 0x4, scoped, tag = 'scoped memory for tpu_custom_call.1']
    #allocation7 [shape = 'u8[4096]{0}', space=vmem, size = 0x1000, scoped, tag = 'input window, operand 2, single buffered']
    #allocation8 [shape = 'u8[32768]{0}', space=vmem, size = 0x8000, scoped, tag = 'output window, operand 0, single buffered']
    %10 = vsyncpa [#allocation3], 0
    %11 = vsyncpa [#allocation6], 0
    %12 = vsyncpa [#allocation4], 0
    // Predicated region
    $region2: #{tpu_custom_call.1} parent=1 // pred_check
      _
    $region3: #{tpu_custom_call.1} parent=1 // pred_check_branch
      %14 = sbr.rel (0) target = $region5
    $region4: #{tpu_custom_call.1} parent=1 // pred_region
      %s16 = ssub.s32 128, 128
      %17 = vsyncadd [#allocation3], %s16
      %s19 = sshll.u32 [#allocation2], 4
      %s20 = int_to_ptr.vmem [resolvable:$true] %s19
      %22 = dma.hbm_to_vmem [thread:$0]  %s0, 128, %s20, [#allocation3]
    $region5: #{tpu_custom_call.1} parent=1 // pred_fallthru
      _
    // Predicated region
    $region6: #{tpu_custom_call.1} parent=1 // pred_check
      _
    $region7: #{tpu_custom_call.1} parent=1 // pred_check_branch
      %24 = sbr.rel (0) target = $region9
    $region8: #{tpu_custom_call.1} parent=1 // pred_region
      %s26 = ssub.s32 8192, 8192
      %27 = vsyncadd [#allocation6], %s26
      %s28 = sshll.u32 [#allocation5], 4
      %s29 = int_to_ptr.vmem [resolvable:$true] %s28
      %34 = dma.hbm_to_vmem [thread:$0]  %s1, 8192, %s29, [#allocation6], 512, 512, 32
    $region9: #{tpu_custom_call.1} parent=1 // pred_fallthru
      _
    // Predicated region
    $region10: #{tpu_custom_call.1} parent=1 // pred_check
      _
    $region11: #{tpu_custom_call.1} parent=1 // pred_check_branch
      %36 = sbr.rel (0) target = $region13
    $region12: #{tpu_custom_call.1} parent=1 // pred_region
      %s38 = ssub.s32 128, 128
      %39 = vsyncadd [#allocation6], %s38
      %s41 = sshll.u32 [#allocation7], 4
      %s42 = int_to_ptr.vmem [resolvable:$true] %s41
      %44 = dma.hbm_to_vmem [thread:$0]  %s2, 128, %s42, [#allocation6]
    $region13: #{tpu_custom_call.1} parent=1 // pred_fallthru
      _
    // Predicated region
    $region14: #{tpu_custom_call.1} parent=1 // pred_check
      _
    $region15: #{tpu_custom_call.1} parent=1 // pred_check_branch
      %46 = sbr.rel (0) target = $region17
    $region16: #{tpu_custom_call.1} parent=1 // pred_region
      _
    $region17: #{tpu_custom_call.1} parent=1 // pred_fallthru
      _
    // Predicated region
    $region18: #{tpu_custom_call.1} parent=1 // pred_check
      _
    $region19: #{tpu_custom_call.1} parent=1 // pred_check_branch
      %48 = sbr.rel (0) target = $region21
    $region20: #{tpu_custom_call.1} parent=1 // pred_region
      _
    $region21: #{tpu_custom_call.1} parent=1 // pred_fallthru
      _
    // Predicated region
    $region22: #{tpu_custom_call.1} parent=1 // pred_check
      _
    $region23: #{tpu_custom_call.1} parent=1 // pred_check_branch
      %50 = sbr.rel (0) target = $region25
    $region24: #{tpu_custom_call.1} parent=1 // pred_region
      %51 = dma.done [#allocation3], 128
    $region25: #{tpu_custom_call.1} parent=1 // pred_fallthru
      _
    // Predicated region
    $region26: #{tpu_custom_call.1} parent=1 // pred_check
      _
    $region27: #{tpu_custom_call.1} parent=1 // pred_check_branch
      %53 = sbr.rel (0) target = $region29
    $region28: #{tpu_custom_call.1} parent=1 // pred_region
      %54 = dma.done [#allocation6], 8192
    $region29: #{tpu_custom_call.1} parent=1 // pred_fallthru
      _
    // Predicated region
    $region30: #{tpu_custom_call.1} parent=1 // pred_check
      _
    $region31: #{tpu_custom_call.1} parent=1 // pred_check_branch
      %56 = sbr.rel (0) target = $region33
    $region32: #{tpu_custom_call.1} parent=1 // pred_region
      %57 = dma.done [#allocation6], 128
    $region33: #{tpu_custom_call.1} parent=1 // pred_fallthru
      _
    %v59 = vld [vmem:[#allocation5] sm:$0xff]
    %v60 = vld [vmem:[#allocation5 + $0x8] sm:$0xff]
    %v61 = vld [vmem:[#allocation5 + $0x10] sm:$0xff]
    %v62 = vld [vmem:[#allocation5 + $0x18] sm:$0xff]
    %v63 = vld [vmem:[#allocation5 + $0x20] sm:$0xff]
    %v64 = vld [vmem:[#allocation5 + $0x28] sm:$0xff]
    %v65 = vld [vmem:[#allocation5 + $0x30] sm:$0xff]
    %v66 = vld [vmem:[#allocation5 + $0x38] sm:$0xff]
    %v67 = vld [vmem:[#allocation5 + $0x40] sm:$0xff]
    %v68 = vld [vmem:[#allocation5 + $0x48] sm:$0xff]
    %v69 = vld [vmem:[#allocation5 + $0x50] sm:$0xff]
    %v70 = vld [vmem:[#allocation5 + $0x58] sm:$0xff]
    %v71 = vld [vmem:[#allocation5 + $0x60] sm:$0xff]
    %v72 = vld [vmem:[#allocation5 + $0x68] sm:$0xff]
    %v73 = vld [vmem:[#allocation5 + $0x70] sm:$0xff]
    %v74 = vld [vmem:[#allocation5 + $0x78] sm:$0xff]
    %v75 = vld [vmem:[#allocation5 + $0x80] sm:$0xff]
    %v76 = vld [vmem:[#allocation5 + $0x88] sm:$0xff]
    %v77 = vld [vmem:[#allocation5 + $0x90] sm:$0xff]
    %v78 = vld [vmem:[#allocation5 + $0x98] sm:$0xff]
    %v79 = vld [vmem:[#allocation5 + $0xa0] sm:$0xff]
    %v80 = vld [vmem:[#allocation5 + $0xa8] sm:$0xff]
    %v81 = vld [vmem:[#allocation5 + $0xb0] sm:$0xff]
    %v82 = vld [vmem:[#allocation5 + $0xb8] sm:$0xff]
    %v83 = vld [vmem:[#allocation5 + $0xc0] sm:$0xff]
    %v84 = vld [vmem:[#allocation5 + $0xc8] sm:$0xff]
    %v85 = vld [vmem:[#allocation5 + $0xd0] sm:$0xff]
    %v86 = vld [vmem:[#allocation5 + $0xd8] sm:$0xff]
    %v87 = vld [vmem:[#allocation5 + $0xe0] sm:$0xff]
    %v88 = vld [vmem:[#allocation5 + $0xe8] sm:$0xff]
    %v89 = vld [vmem:[#allocation5 + $0xf0] sm:$0xff]
    %v90 = vld [vmem:[#allocation5 + $0xf8] sm:$0xff]
    %v91 = vld [vmem:[#allocation5 + $0x100] sm:$0xff]
    %v92 = vld [vmem:[#allocation5 + $0x108] sm:$0xff]
    %v93 = vld [vmem:[#allocation5 + $0x110] sm:$0xff]
    %v94 = vld [vmem:[#allocation5 + $0x118] sm:$0xff]
    %v95 = vld [vmem:[#allocation5 + $0x120] sm:$0xff]
    %v96 = vld [vmem:[#allocation5 + $0x128] sm:$0xff]
    %v97 = vld [vmem:[#allocation5 + $0x130] sm:$0xff]
    %v98 = vld [vmem:[#allocation5 + $0x138] sm:$0xff]
    %v99 = vld [vmem:[#allocation5 + $0x140] sm:$0xff]
    %v100 = vld [vmem:[#allocation5 + $0x148] sm:$0xff]
    %v101 = vld [vmem:[#allocation5 + $0x150] sm:$0xff]
    %v102 = vld [vmem:[#allocation5 + $0x158] sm:$0xff]
    %v103 = vld [vmem:[#allocation5 + $0x160] sm:$0xff]
    %v104 = vld [vmem:[#allocation5 + $0x168] sm:$0xff]
    %v105 = vld [vmem:[#allocation5 + $0x170] sm:$0xff]
    %v106 = vld [vmem:[#allocation5 + $0x178] sm:$0xff]
    %v107 = vld [vmem:[#allocation5 + $0x180] sm:$0xff]
    %v108 = vld [vmem:[#allocation5 + $0x188] sm:$0xff]
    %v109 = vld [vmem:[#allocation5 + $0x190] sm:$0xff]
    %v110 = vld [vmem:[#allocation5 + $0x198] sm:$0xff]
    %v111 = vld [vmem:[#allocation5 + $0x1a0] sm:$0xff]
    %v112 = vld [vmem:[#allocation5 + $0x1a8] sm:$0xff]
    %v113 = vld [vmem:[#allocation5 + $0x1b0] sm:$0xff]
    %v114 = vld [vmem:[#allocation5 + $0x1b8] sm:$0xff]
    %v115 = vld [vmem:[#allocation5 + $0x1c0] sm:$0xff]
    %v116 = vld [vmem:[#allocation5 + $0x1c8] sm:$0xff]
    %v117 = vld [vmem:[#allocation5 + $0x1d0] sm:$0xff]
    %v118 = vld [vmem:[#allocation5 + $0x1d8] sm:$0xff]
    %v119 = vld [vmem:[#allocation5 + $0x1e0] sm:$0xff]
    %v120 = vld [vmem:[#allocation5 + $0x1e8] sm:$0xff]
    %v121 = vld [vmem:[#allocation5 + $0x1f0] sm:$0xff]
    %v122 = vld [vmem:[#allocation5 + $0x1f8] sm:$0xff]
    %v123 = vld [vmem:[#allocation2] sm:$0xff]
    %v124 = vpack.c.bf16 %v123, %v123
    %v125 = vld [vmem:[#allocation7] sm:$0xff]
    %v127 = vlaneseq
    %v128 = vshrl.u32 %v127, 7
    %v129 = vsub.s32 0, %v128
    %v130 = vrot.slane %v125, %v129
    %v131 = vlaneseq
    %v132 = vshrl.u32 %v131, 7
    %v133 = vsub.s32 1, %v132
    %v134 = vrot.slane %v125, %v133
    %v135 = vlaneseq
    %v136 = vshrl.u32 %v135, 7
    %v137 = vsub.s32 2, %v136
    %v138 = vrot.slane %v125, %v137
    %v139 = vlaneseq
    %v140 = vshrl.u32 %v139, 7
    %v141 = vsub.s32 3, %v140
    %v142 = vrot.slane %v125, %v141
    %v143 = vlaneseq
    %v144 = vshrl.u32 %v143, 7
    %v145 = vsub.s32 4, %v144
    %v146 = vrot.slane %v125, %v145
    %v147 = vlaneseq
    %v148 = vshrl.u32 %v147, 7
    %v149 = vsub.s32 5, %v148
    %v150 = vrot.slane %v125, %v149
    %v151 = vlaneseq
    %v152 = vshrl.u32 %v151, 7
    %v153 = vsub.s32 6, %v152
    %v154 = vrot.slane %v125, %v153
    %v155 = vlaneseq
    %v156 = vshrl.u32 %v155, 7
    %v157 = vsub.s32 7, %v156
    %v158 = vrot.slane %v125, %v157
    %v231 = vunpack.c.l.b16 %v59
    %v232 = vunpack.c.h.b16 %v59
    %v233 = vunpack.c.l.b16 %v60
    %v234 = vunpack.c.h.b16 %v60
    %v235 = vunpack.c.l.b16 %v61
    %v236 = vunpack.c.h.b16 %v61
    %v237 = vunpack.c.l.b16 %v62
    %v238 = vunpack.c.h.b16 %v62
    %v239 = vunpack.c.l.b16 %v63
    %v240 = vunpack.c.h.b16 %v63
    %v241 = vunpack.c.l.b16 %v64
    %v242 = vunpack.c.h.b16 %v64
    %v243 = vunpack.c.l.b16 %v65
    %v244 = vunpack.c.h.b16 %v65
    %v245 = vunpack.c.l.b16 %v66
    %v246 = vunpack.c.h.b16 %v66
    %v247 = vunpack.c.l.b16 %v67
    %v248 = vunpack.c.h.b16 %v67
    %v249 = vunpack.c.l.b16 %v68
    %v250 = vunpack.c.h.b16 %v68
    %v251 = vunpack.c.l.b16 %v69
    %v252 = vunpack.c.h.b16 %v69
    %v253 = vunpack.c.l.b16 %v70
    %v254 = vunpack.c.h.b16 %v70
    %v255 = vunpack.c.l.b16 %v71
    %v256 = vunpack.c.h.b16 %v71
    %v257 = vunpack.c.l.b16 %v72
    %v258 = vunpack.c.h.b16 %v72
    %v259 = vunpack.c.l.b16 %v73
    %v260 = vunpack.c.h.b16 %v73
    %v261 = vunpack.c.l.b16 %v74
    %v262 = vunpack.c.h.b16 %v74
    %v263 = vunpack.c.l.b16 %v75
    %v264 = vunpack.c.h.b16 %v75
    %v265 = vunpack.c.l.b16 %v76
    %v266 = vunpack.c.h.b16 %v76
    %v267 = vunpack.c.l.b16 %v77
    %v268 = vunpack.c.h.b16 %v77
    %v269 = vunpack.c.l.b16 %v78
    %v270 = vunpack.c.h.b16 %v78
    %v271 = vunpack.c.l.b16 %v79
    %v272 = vunpack.c.h.b16 %v79
    %v273 = vunpack.c.l.b16 %v80
    %v274 = vunpack.c.h.b16 %v80
    %v275 = vunpack.c.l.b16 %v81
    %v276 = vunpack.c.h.b16 %v81
    %v277 = vunpack.c.l.b16 %v82
    %v278 = vunpack.c.h.b16 %v82
    %v279 = vunpack.c.l.b16 %v83
    %v280 = vunpack.c.h.b16 %v83
    %v281 = vunpack.c.l.b16 %v84
    %v282 = vunpack.c.h.b16 %v84
    %v283 = vunpack.c.l.b16 %v85
    %v284 = vunpack.c.h.b16 %v85
    %v285 = vunpack.c.l.b16 %v86
    %v286 = vunpack.c.h.b16 %v86
    %v287 = vunpack.c.l.b16 %v87
    %v288 = vunpack.c.h.b16 %v87
    %v289 = vunpack.c.l.b16 %v88
    %v290 = vunpack.c.h.b16 %v88
    %v291 = vunpack.c.l.b16 %v89
    %v292 = vunpack.c.h.b16 %v89
    %v293 = vunpack.c.l.b16 %v90
    %v294 = vunpack.c.h.b16 %v90
    %v295 = vunpack.c.l.b16 %v91
    %v296 = vunpack.c.h.b16 %v91
    %v297 = vunpack.c.l.b16 %v92
    %v298 = vunpack.c.h.b16 %v92
    %v299 = vunpack.c.l.b16 %v93
    %v300 = vunpack.c.h.b16 %v93
    %v301 = vunpack.c.l.b16 %v94
    %v302 = vunpack.c.h.b16 %v94
    %v303 = vunpack.c.l.b16 %v95
    %v304 = vunpack.c.h.b16 %v95
    %v305 = vunpack.c.l.b16 %v96
    %v306 = vunpack.c.h.b16 %v96
    %v307 = vunpack.c.l.b16 %v97
    %v308 = vunpack.c.h.b16 %v97
    %v309 = vunpack.c.l.b16 %v98
    %v310 = vunpack.c.h.b16 %v98
    %v311 = vunpack.c.l.b16 %v99
    %v312 = vunpack.c.h.b16 %v99
    %v313 = vunpack.c.l.b16 %v100
    %v314 = vunpack.c.h.b16 %v100
    %v315 = vunpack.c.l.b16 %v101
    %v316 = vunpack.c.h.b16 %v101
    %v317 = vunpack.c.l.b16 %v102
    %v318 = vunpack.c.h.b16 %v102
    %v319 = vunpack.c.l.b16 %v103
    %v320 = vunpack.c.h.b16 %v103
    %v321 = vunpack.c.l.b16 %v104
    %v322 = vunpack.c.h.b16 %v104
    %v323 = vunpack.c.l.b16 %v105
    %v324 = vunpack.c.h.b16 %v105
    %v325 = vunpack.c.l.b16 %v106
    %v326 = vunpack.c.h.b16 %v106
    %v327 = vunpack.c.l.b16 %v107
    %v328 = vunpack.c.h.b16 %v107
    %v329 = vunpack.c.l.b16 %v108
    %v330 = vunpack.c.h.b16 %v108
    %v331 = vunpack.c.l.b16 %v109
    %v332 = vunpack.c.h.b16 %v109
    %v333 = vunpack.c.l.b16 %v110
    %v334 = vunpack.c.h.b16 %v110
    %v335 = vunpack.c.l.b16 %v111
    %v336 = vunpack.c.h.b16 %v111
    %v337 = vunpack.c.l.b16 %v112
    %v338 = vunpack.c.h.b16 %v112
    %v339 = vunpack.c.l.b16 %v113
    %v340 = vunpack.c.h.b16 %v113
    %v341 = vunpack.c.l.b16 %v114
    %v342 = vunpack.c.h.b16 %v114
    %v343 = vunpack.c.l.b16 %v115
    %v344 = vunpack.c.h.b16 %v115
    %v345 = vunpack.c.l.b16 %v116
    %v346 = vunpack.c.h.b16 %v116
    %v347 = vunpack.c.l.b16 %v117
    %v348 = vunpack.c.h.b16 %v117
    %v349 = vunpack.c.l.b16 %v118
    %v350 = vunpack.c.h.b16 %v118
    %v351 = vunpack.c.l.b16 %v119
    %v352 = vunpack.c.h.b16 %v119
    %v353 = vunpack.c.l.b16 %v120
    %v354 = vunpack.c.h.b16 %v120
    %v355 = vunpack.c.l.b16 %v121
    %v356 = vunpack.c.h.b16 %v121
    %v357 = vunpack.c.l.b16 %v122
    %v358 = vunpack.c.h.b16 %v122
    %v359 = vpack.c.b16 %v239, %v231
    %v360 = vpack.c.b16 %v240, %v232
    %v361 = vpack.c.b16 %v241, %v233
    %v362 = vpack.c.b16 %v242, %v234
    %v363 = vpack.c.b16 %v243, %v235
    %v364 = vpack.c.b16 %v244, %v236
    %v365 = vpack.c.b16 %v245, %v237
    %v366 = vpack.c.b16 %v246, %v238
    %v367 = vpack.c.b16 %v255, %v247
    %v368 = vpack.c.b16 %v256, %v248
    %v369 = vpack.c.b16 %v257, %v249
    %v370 = vpack.c.b16 %v258, %v250
    %v371 = vpack.c.b16 %v259, %v251
    %v372 = vpack.c.b16 %v260, %v252
    %v373 = vpack.c.b16 %v261, %v253
    %v374 = vpack.c.b16 %v262, %v254
    %v375 = vpack.c.b16 %v271, %v263
    %v376 = vpack.c.b16 %v272, %v264
    %v377 = vpack.c.b16 %v273, %v265
    %v378 = vpack.c.b16 %v274, %v266
    %v379 = vpack.c.b16 %v275, %v267
    %v380 = vpack.c.b16 %v276, %v268
    %v381 = vpack.c.b16 %v277, %v269
    %v382 = vpack.c.b16 %v278, %v270
    %v383 = vpack.c.b16 %v287, %v279
    %v384 = vpack.c.b16 %v288, %v280
    %v385 = vpack.c.b16 %v289, %v281
    %v386 = vpack.c.b16 %v290, %v282
    %v387 = vpack.c.b16 %v291, %v283
    %v388 = vpack.c.b16 %v292, %v284
    %v389 = vpack.c.b16 %v293, %v285
    %v390 = vpack.c.b16 %v294, %v286
    %v391 = vpack.c.b16 %v303, %v295
    %v392 = vpack.c.b16 %v304, %v296
    %v393 = vpack.c.b16 %v305, %v297
    %v394 = vpack.c.b16 %v306, %v298
    %v395 = vpack.c.b16 %v307, %v299
    %v396 = vpack.c.b16 %v308, %v300
    %v397 = vpack.c.b16 %v309, %v301
    %v398 = vpack.c.b16 %v310, %v302
    %v399 = vpack.c.b16 %v319, %v311
    %v400 = vpack.c.b16 %v320, %v312
    %v401 = vpack.c.b16 %v321, %v313
    %v402 = vpack.c.b16 %v322, %v314
    %v403 = vpack.c.b16 %v323, %v315
    %v404 = vpack.c.b16 %v324, %v316
    %v405 = vpack.c.b16 %v325, %v317
    %v406 = vpack.c.b16 %v326, %v318
    %v407 = vpack.c.b16 %v335, %v327
    %v408 = vpack.c.b16 %v336, %v328
    %v409 = vpack.c.b16 %v337, %v329
    %v410 = vpack.c.b16 %v338, %v330
    %v411 = vpack.c.b16 %v339, %v331
    %v412 = vpack.c.b16 %v340, %v332
    %v413 = vpack.c.b16 %v341, %v333
    %v414 = vpack.c.b16 %v342, %v334
    %v415 = vpack.c.b16 %v351, %v343
    %v416 = vpack.c.b16 %v352, %v344
    %v417 = vpack.c.b16 %v353, %v345
    %v418 = vpack.c.b16 %v354, %v346
    %v419 = vpack.c.b16 %v355, %v347
    %v420 = vpack.c.b16 %v356, %v348
    %v421 = vpack.c.b16 %v357, %v349
    %v422 = vpack.c.b16 %v358, %v350
    %487 = vmatprep.subr.bf16.mxu0 %v360
    %488 = vmatpush1.bf16.msra.mxu0 %v359
    %489 = vmatprep.subr.bf16.mxu0 %v368
    %490 = vmatpush1.bf16.msra.mxu0 %v367
    %491 = vmatprep.subr.bf16.mxu0 %v376
    %492 = vmatpush1.bf16.msra.mxu0 %v375
    %493 = vmatprep.subr.bf16.mxu0 %v384
    %494 = vmatpush1.bf16.msra.mxu0 %v383
    %495 = vmatprep.subr.bf16.mxu0 %v392
    %496 = vmatpush1.bf16.msra.mxu0 %v391
    %497 = vmatprep.subr.bf16.mxu0 %v400
    %498 = vmatpush1.bf16.msra.mxu0 %v399
    %499 = vmatprep.subr.bf16.mxu0 %v408
    %500 = vmatpush1.bf16.msra.mxu0 %v407
    %501 = vmatprep.subr.bf16.mxu0 %v416
    %502 = vmatpush1.bf16.msra.mxu0 %v415
    %503 = vmatprep.subr.bf16.mxu0 0
    %504 = vmatpush1.bf16.msra.mxu0 0
    %505 = vmatprep.subr.bf16.mxu0 0
    %506 = vmatpush1.bf16.msra.mxu0 0
    %507 = vmatprep.subr.bf16.mxu0 0
    %508 = vmatpush1.bf16.msra.mxu0 0
    %509 = vmatprep.subr.bf16.mxu0 0
    %510 = vmatpush1.bf16.msra.mxu0 0
    %511 = vmatprep.subr.bf16.mxu0 0
    %512 = vmatpush1.bf16.msra.mxu0 0
    %513 = vmatprep.subr.bf16.mxu0 0
    %514 = vmatpush1.bf16.msra.mxu0 0
    %515 = vmatprep.subr.bf16.mxu0 0
    %516 = vmatpush1.bf16.msra.mxu0 0
    %517 = vmatprep.subr.bf16.mxu0 0
    %518 = vmatpush1.bf16.msra.mxu0 0
    %519 = vmatprep.mubr.bf16.mxu0 0
    %520 = vmatmul.mubr.bf16.gmra.mrb[0].mxu0 %v124
    %v521 = vpop.f32.mrb[0].mxu0
    %v522 = vadd.f32 %v130, %v521
    %v523 = vpop.f32.mrb[0].mxu0
    %v524 = vadd.f32 %v134, %v523
    %v525 = vpop.f32.mrb[0].mxu0
    %v526 = vpop.f32.mrb[0].mxu0
    %527 = vdwg.mxu0
    %528 = vmatprep.subr.bf16.mxu0 %v362
    %529 = vmatpush1.bf16.msra.mxu0 %v361
    %530 = vmatprep.subr.bf16.mxu0 %v370
    %531 = vmatpush1.bf16.msra.mxu0 %v369
    %532 = vmatprep.subr.bf16.mxu0 %v378
    %533 = vmatpush1.bf16.msra.mxu0 %v377
    %534 = vmatprep.subr.bf16.mxu0 %v386
    %535 = vmatpush1.bf16.msra.mxu0 %v385
    %536 = vmatprep.subr.bf16.mxu0 %v394
    %537 = vmatpush1.bf16.msra.mxu0 %v393
    %538 = vmatprep.subr.bf16.mxu0 %v402
    %539 = vmatpush1.bf16.msra.mxu0 %v401
    %540 = vmatprep.subr.bf16.mxu0 %v410
    %541 = vmatpush1.bf16.msra.mxu0 %v409
    %542 = vmatprep.subr.bf16.mxu0 %v418
    %543 = vmatpush1.bf16.msra.mxu0 %v417
    %544 = vmatprep.subr.bf16.mxu0 0
    %545 = vmatpush1.bf16.msra.mxu0 0
    %546 = vmatprep.subr.bf16.mxu0 0
    %547 = vmatpush1.bf16.msra.mxu0 0
    %548 = vmatprep.subr.bf16.mxu0 0
    %549 = vmatpush1.bf16.msra.mxu0 0
    %550 = vmatprep.subr.bf16.mxu0 0
    %551 = vmatpush1.bf16.msra.mxu0 0
    %552 = vmatprep.subr.bf16.mxu0 0
    %553 = vmatpush1.bf16.msra.mxu0 0
    %554 = vmatprep.subr.bf16.mxu0 0
    %555 = vmatpush1.bf16.msra.mxu0 0
    %556 = vmatprep.subr.bf16.mxu0 0
    %557 = vmatpush1.bf16.msra.mxu0 0
    %558 = vmatprep.subr.bf16.mxu0 0
    %559 = vmatpush1.bf16.msra.mxu0 0
    %560 = vmatprep.mubr.bf16.mxu0 0
    %561 = vmatmul.mubr.bf16.gmra.mrb[0].mxu0 %v124
    %v562 = vpop.f32.mrb[0].mxu0
    %v563 = vadd.f32 %v138, %v562
    %v564 = vpop.f32.mrb[0].mxu0
    %v565 = vadd.f32 %v142, %v564
    %v566 = vpop.f32.mrb[0].mxu0
    %v567 = vpop.f32.mrb[0].mxu0
    %568 = vdwg.mxu0
    %569 = vmatprep.subr.bf16.mxu0 %v364
    %570 = vmatpush1.bf16.msra.mxu0 %v363
    %571 = vmatprep.subr.bf16.mxu0 %v372
    %572 = vmatpush1.bf16.msra.mxu0 %v371
    %573 = vmatprep.subr.bf16.mxu0 %v380
    %574 = vmatpush1.bf16.msra.mxu0 %v379
    %575 = vmatprep.subr.bf16.mxu0 %v388
    %576 = vmatpush1.bf16.msra.mxu0 %v387
    %577 = vmatprep.subr.bf16.mxu0 %v396
    %578 = vmatpush1.bf16.msra.mxu0 %v395
    %579 = vmatprep.subr.bf16.mxu0 %v404
    %580 = vmatpush1.bf16.msra.mxu0 %v403
    %581 = vmatprep.subr.bf16.mxu0 %v412
    %582 = vmatpush1.bf16.msra.mxu0 %v411
    %583 = vmatprep.subr.bf16.mxu0 %v420
    %584 = vmatpush1.bf16.msra.mxu0 %v419
    %585 = vmatprep.subr.bf16.mxu0 0
    %586 = vmatpush1.bf16.msra.mxu0 0
    %587 = vmatprep.subr.bf16.mxu0 0
    %588 = vmatpush1.bf16.msra.mxu0 0
    %589 = vmatprep.subr.bf16.mxu0 0
    %590 = vmatpush1.bf16.msra.mxu0 0
    %591 = vmatprep.subr.bf16.mxu0 0
    %592 = vmatpush1.bf16.msra.mxu0 0
    %593 = vmatprep.subr.bf16.mxu0 0
    %594 = vmatpush1.bf16.msra.mxu0 0
    %595 = vmatprep.subr.bf16.mxu0 0
    %596 = vmatpush1.bf16.msra.mxu0 0
    %597 = vmatprep.subr.bf16.mxu0 0
    %598 = vmatpush1.bf16.msra.mxu0 0
    %599 = vmatprep.subr.bf16.mxu0 0
    %600 = vmatpush1.bf16.msra.mxu0 0
    %601 = vmatprep.mubr.bf16.mxu0 0
    %602 = vmatmul.mubr.bf16.gmra.mrb[0].mxu0 %v124
    %v603 = vpop.f32.mrb[0].mxu0
    %v604 = vadd.f32 %v146, %v603
    %v605 = vpop.f32.mrb[0].mxu0
    %v606 = vadd.f32 %v150, %v605
    %v607 = vpop.f32.mrb[0].mxu0
    %v608 = vpop.f32.mrb[0].mxu0
    %609 = vdwg.mxu0
    %610 = vmatprep.subr.bf16.mxu0 %v366
    %611 = vmatpush1.bf16.msra.mxu0 %v365
    %612 = vmatprep.subr.bf16.mxu0 %v374
    %613 = vmatpush1.bf16.msra.mxu0 %v373
    %614 = vmatprep.subr.bf16.mxu0 %v382
    %615 = vmatpush1.bf16.msra.mxu0 %v381
    %616 = vmatprep.subr.bf16.mxu0 %v390
    %617 = vmatpush1.bf16.msra.mxu0 %v389
    %618 = vmatprep.subr.bf16.mxu0 %v398
    %619 = vmatpush1.bf16.msra.mxu0 %v397
    %620 = vmatprep.subr.bf16.mxu0 %v406
    %621 = vmatpush1.bf16.msra.mxu0 %v405
    %622 = vmatprep.subr.bf16.mxu0 %v414
    %623 = vmatpush1.bf16.msra.mxu0 %v413
    %624 = vmatprep.subr.bf16.mxu0 %v422
    %625 = vmatpush1.bf16.msra.mxu0 %v421
    %626 = vmatprep.subr.bf16.mxu0 0
    %627 = vmatpush1.bf16.msra.mxu0 0
    %628 = vmatprep.subr.bf16.mxu0 0
    %629 = vmatpush1.bf16.msra.mxu0 0
    %630 = vmatprep.subr.bf16.mxu0 0
    %631 = vmatpush1.bf16.msra.mxu0 0
    %632 = vmatprep.subr.bf16.mxu0 0
    %633 = vmatpush1.bf16.msra.mxu0 0
    %634 = vmatprep.subr.bf16.mxu0 0
    %635 = vmatpush1.bf16.msra.mxu0 0
    %636 = vmatprep.subr.bf16.mxu0 0
    %637 = vmatpush1.bf16.msra.mxu0 0
    %638 = vmatprep.subr.bf16.mxu0 0
    %639 = vmatpush1.bf16.msra.mxu0 0
    %640 = vmatprep.subr.bf16.mxu0 0
    %641 = vmatpush1.bf16.msra.mxu0 0
    %642 = vmatprep.mubr.bf16.mxu0 0
    %643 = vmatmul.mubr.bf16.gmra.mrb[0].mxu0 %v124
    %v644 = vpop.f32.mrb[0].mxu0
    %v645 = vadd.f32 %v154, %v644
    %v646 = vpop.f32.mrb[0].mxu0
    %v647 = vadd.f32 %v158, %v646
    %v648 = vpop.f32.mrb[0].mxu0
    %v649 = vpop.f32.mrb[0].mxu0
    %650 = vdwg.mxu0
    %v651 = vld [vmem:[%s3] sm:$0x3]
    %v652 = vld [vmem:[%s4] sm:$0x3]
    %v653 = vadd.f32 %v522, %v524
    %654 = vadd.xlane.f32.xlu0 %v653
    %v655 = vpop.xlane.xlu0 %654
    %v656 = vrcp.pop 256.0
    %v657 = vmul.f32 %v655, %v656
    %v658 = vsub.f32 %v522, %v657
    %v659 = vsub.f32 %v524, %v657
    %v660 = vmul.f32 %v658, %v658
    %v661 = vmul.f32 %v659, %v659
    %v662 = vadd.f32 %v660, %v661
    %663 = vadd.xlane.f32.xlu0 %v662
    %v664 = vpop.xlane.xlu0 %663
    %v665 = vmul.f32 %v664, %v656
    %v666 = vadd.f32 %v665, 1e-05
    %v667 = vrsqrt.pop %v666
    %v668 = vmul.f32 %v658, %v667
    %v669 = vmul.f32 %v659, %v667
    %v671 = vlaneseq
    %v672 = vshrl.u32 %v671, 7
    %v673 = vsub.s32 0, %v672
    %v674 = vrot.slane %v651, %v673
    %v675 = vlaneseq
    %v676 = vshrl.u32 %v675, 7
    %v677 = vsub.s32 1, %v676
    %v678 = vrot.slane %v651, %v677
    %v681 = vmul.f32 %v668, %v674
    %v682 = vmul.f32 %v669, %v678
    %v684 = vlaneseq
    %v685 = vshrl.u32 %v684, 7
    %v686 = vsub.s32 0, %v685
    %v687 = vrot.slane %v652, %v686
    %v688 = vlaneseq
    %v689 = vshrl.u32 %v688, 7
    %v690 = vsub.s32 1, %v689
    %v691 = vrot.slane %v652, %v690
    %v694 = vadd.f32 %v681, %v687
    %v695 = vadd.f32 %v682, %v691
    %696 = vst [vmem:[#allocation8] sm:$0xff] %v694
    %697 = vst [vmem:[#allocation8 + $0x8] sm:$0xff] %v695
    %v698 = vadd.f32 %v563, %v565
    %699 = vadd.xlane.f32.xlu0 %v698
    %v700 = vpop.xlane.xlu0 %699
    %v701 = vmul.f32 %v700, %v656
    %v702 = vsub.f32 %v563, %v701
    %v703 = vsub.f32 %v565, %v701
    %v704 = vmul.f32 %v702, %v702
    %v705 = vmul.f32 %v703, %v703
    %v706 = vadd.f32 %v704, %v705
    %707 = vadd.xlane.f32.xlu0 %v706
    %v708 = vpop.xlane.xlu0 %707
    %v709 = vmul.f32 %v708, %v656
    %v710 = vadd.f32 %v709, 1e-05
    %v711 = vrsqrt.pop %v710
    %v712 = vmul.f32 %v702, %v711
    %v713 = vmul.f32 %v703, %v711
    %v714 = vmul.f32 %v712, %v674
    %v715 = vmul.f32 %v713, %v678
    %v716 = vadd.f32 %v714, %v687
    %v717 = vadd.f32 %v715, %v691
    %718 = vst [vmem:[#allocation8 + $0x10] sm:$0xff] %v716
    %719 = vst [vmem:[#allocation8 + $0x18] sm:$0xff] %v717
    %v720 = vadd.f32 %v604, %v606
    %721 = vadd.xlane.f32.xlu0 %v720
    %v722 = vpop.xlane.xlu0 %721
    %v723 = vmul.f32 %v722, %v656
    %v724 = vsub.f32 %v604, %v723
    %v725 = vsub.f32 %v606, %v723
    %v726 = vmul.f32 %v724, %v724
    %v727 = vmul.f32 %v725, %v725
    %v728 = vadd.f32 %v726, %v727
    %729 = vadd.xlane.f32.xlu0 %v728
    %v730 = vpop.xlane.xlu0 %729
    %v731 = vmul.f32 %v730, %v656
    %v732 = vadd.f32 %v731, 1e-05
    %v733 = vrsqrt.pop %v732
    %v734 = vmul.f32 %v724, %v733
    %v735 = vmul.f32 %v725, %v733
    %v736 = vmul.f32 %v734, %v674
    %v737 = vmul.f32 %v735, %v678
    %v738 = vadd.f32 %v736, %v687
    %v739 = vadd.f32 %v737, %v691
    %740 = vst [vmem:[#allocation8 + $0x20] sm:$0xff] %v738
    %741 = vst [vmem:[#allocation8 + $0x28] sm:$0xff] %v739
    %v742 = vadd.f32 %v645, %v647
    %743 = vadd.xlane.f32.xlu0 %v742
    %v744 = vpop.xlane.xlu0 %743
    %v745 = vmul.f32 %v744, %v656
    %v746 = vsub.f32 %v645, %v745
    %v747 = vsub.f32 %v647, %v745
    %v748 = vmul.f32 %v746, %v746
    %v749 = vmul.f32 %v747, %v747
    %v750 = vadd.f32 %v748, %v749
    %751 = vadd.xlane.f32.xlu0 %v750
    %v752 = vpop.xlane.xlu0 %751
    %v753 = vmul.f32 %v752, %v656
    %v754 = vadd.f32 %v753, 1e-05
    %v755 = vrsqrt.pop %v754
    %v756 = vmul.f32 %v746, %v755
    %v757 = vmul.f32 %v747, %v755
    %v758 = vmul.f32 %v756, %v674
    %v759 = vmul.f32 %v757, %v678
    %v760 = vadd.f32 %v758, %v687
    %v761 = vadd.f32 %v759, %v691
    %762 = vst [vmem:[#allocation8 + $0x30] sm:$0xff] %v760
    %763 = vst [vmem:[#allocation8 + $0x38] sm:$0xff] %v761
    // Predicated region
    $region34: #{tpu_custom_call.1} parent=1 // pred_check
      _
    $region35: #{tpu_custom_call.1} parent=1 // pred_check_branch
      %765 = sbr.rel (0) target = $region37
    $region36: #{tpu_custom_call.1} parent=1 // pred_region
      %s767 = ssub.s32 1024, 1024
      %768 = vsyncadd [#allocation4], %s767
      %s770 = sshll.u32 [#allocation8], 4
      %s771 = int_to_ptr.vmem [resolvable:$true] %s770
      %773 = dma.vmem_to_hbm [thread:$0]  %s771, 1024, %s5, [#allocation4]
    $region37: #{tpu_custom_call.1} parent=1 // pred_fallthru
      _
    // Predicated region
    $region38: #{tpu_custom_call.1} parent=1 // pred_check
      _
    $region39: #{tpu_custom_call.1} parent=1 // pred_check_branch
      %775 = sbr.rel (0) target = $region41
    $region40: #{tpu_custom_call.1} parent=1 // pred_region
      %776 = dma.done [#allocation4], 1024
    $region41: #{tpu_custom_call.1} parent=1 // pred_fallthru
      _
    %777 = vsyncpa [#allocation3], 1
    %778 = vsyncpa [#allocation6], 1
    %779 = vsyncpa [#allocation4], 1

</llo_original>
